<compile_context>
chip_gen: v7x
topology: tpu7x:2x2x1
jax: 0.10.0
libtpu: 0.0.40
codegen_flags: <defaults>
</compile_context>

<pallas_src>
import functools

import jax
import jax.numpy as jnp
from jax import lax
from jax.experimental import pallas as pl
from jax.experimental.pallas import tpu as pltpu

_F32 = jnp.float32


# --------------------------------------------------------------------------
# Kernels
# --------------------------------------------------------------------------
def _matmul(x_tile, w_tile):
    # Contract the last dim of both operands -> PyTorch (D_out, D_in) weight is
    # consumed directly, no transpose materialized.
    return lax.dot_general(
        x_tile, w_tile,
        dimension_numbers=(((1,), (1,)), ((), ())),
        preferred_element_type=_F32,
    )


def _bn_epilogue(y, gb_ref, o_ref, relu, eps):
    """Training-mode BatchNorm1d (+ optional LeakyReLU(0.1)) on an f32 (B, tn) tile."""
    gb = gb_ref[...].astype(_F32)                   # (2, tn): row0=gamma, row1=beta
    gamma = gb[0:1, :]
    beta = gb[1:2, :]
    mean = jnp.mean(y, axis=0, keepdims=True)       # (1, tn)
    centered = y - mean
    var = jnp.mean(centered * centered, axis=0, keepdims=True)
    scale = gamma * lax.rsqrt(var + eps)            # gamma folded into the scale
    out = centered * scale + beta                   # 1 mul + 1 add per element
    if relu:
        out = jnp.where(out >= 0, out, 0.1 * out)   # LeakyReLU(0.1)
    o_ref[...] = out.astype(o_ref.dtype)


def _fc_bn_kernel_single(x_ref, w_ref, gb_ref, o_ref, *, relu, eps):
    # Single K step: no accumulator, no predicated init/finalize branches.
    _bn_epilogue(_matmul(x_ref[...], w_ref[...]), gb_ref, o_ref, relu, eps)


def _fc_bn_kernel_multi(x_ref, w_ref, gb_ref, o_ref, acc_ref, *,
                        relu, eps, tk, x_resident):
    k = pl.program_id(1)

    @pl.when(k == 0)
    def _():
        acc_ref[...] = jnp.zeros_like(acc_ref)

    if x_resident:
        # Full x stays resident in VMEM (fetched once); slice the K slab here.
        start = pl.multiple_of(k * tk, 128)
        x_tile = x_ref[:, pl.ds(start, tk)]
    else:
        x_tile = x_ref[...]

    acc_ref[...] += _matmul(x_tile, w_ref[...])

    @pl.when(k == pl.num_programs(1) - 1)
    def _():
        _bn_epilogue(acc_ref[...], gb_ref, o_ref, relu, eps)


# --------------------------------------------------------------------------
# Sizing helpers
# --------------------------------------------------------------------------
def _pick_tile(dim, max_tile, quantum=128):
    """Largest lane-aligned tile <= max_tile dividing dim (full dim if it fits /
    as a last-resort fallback, which is always a legal block shape)."""
    if dim <= max_tile:
        return dim
    t = (max_tile // quantum) * quantum
    while t >= quantum:
        if dim % t == 0:
            return t
        t -= quantum
    # TODO(synk): no lane-aligned divisor (e.g. D_out=1000) -> fall back to the
    # full dim instead of padding/masking; a padded path would bound VMEM better.
    return dim


def _vmem_budget():
    """(physical VMEM bytes, scoped budget with headroom for compiler scratch)."""
    phys = None
    try:
        phys = int(pltpu.get_tpu_info().vmem_capacity_bytes)
    except Exception:
        phys = None
    if not phys or phys <= 0:
        phys = 64 << 20           # conservative: assume v7x-class 64 MiB
    budget = min(int(phys * 0.78), phys - (8 << 20))
    return phys, max(budget, 16 << 20)


def _w_block_spec(block_shape, index_map, buffers):
    """W BlockSpec, optionally with a deeper (3-buffer) pipeline."""
    if buffers > 2:
        try:
            return pl.BlockSpec(block_shape, index_map,
                                pipeline_mode=pl.Buffered(buffers))
        except TypeError:
            pass  # older API without pipeline_mode -> default double-buffering
    return pl.BlockSpec(block_shape, index_map)


# --------------------------------------------------------------------------
# Forward
# --------------------------------------------------------------------------
def fc_forward(x, w, b, gamma, beta, *, relu=False, eps=1e-5,
               out_dtype=None, compute_dtype=None, tn_max=None, tk_max=None):
    """Fused Linear + training-mode BatchNorm1d (+ optional LeakyReLU(0.1)).

    x:(B, D_in)  w:(D_out, D_in)  b:(D_out,)  gamma/beta:(D_out,)  ->  (B, D_out)

    `compute_dtype=jnp.bfloat16` halves W/x HBM traffic (recommended on v5e);
    accumulation and BN math stay f32 regardless.
    """
    del b  # Exactly cancelled by BN's batch-mean subtraction (training mode).

    B, D_in = x.shape
    D_out, D_in_w = w.shape
    assert D_in == D_in_w, "weight / input feature-dim mismatch"
    out_dtype = out_dtype or x.dtype

    if compute_dtype is not None:
        x = x.astype(compute_dtype)
        w = w.astype(compute_dtype)

    xsz = jnp.dtype(x.dtype).itemsize
    wsz = jnp.dtype(w.dtype).itemsize
    osz = jnp.dtype(out_dtype).itemsize

    phys_vmem, budget = _vmem_budget()

    # ---- N (output-feature) tile -----------------------------------------
    tn_cap = 512 if budget >= (80 << 20) else 256
    if tn_max is not None:
        tn_cap = min(tn_cap, tn_max)
    tn = _pick_tile(D_out, tn_cap)
    # v7x-class parts (64 MiB VMEM, 2 TensorCores): guarantee >= 2 tiles on the
    # parallel D_out axis so both cores get work.
    if phys_vmem <= (64 << 20) and D_out // tn == 1 and D_out >= 256:
        tn_half = _pick_tile(D_out, max(tn // 2, 128))
        if D_out // tn_half >= 2:
            tn = tn_half

    # ---- K (contraction) tile + residency / buffering ---------------------
    w_buffers = 3 if B <= 512 else 2        # deepen W pipeline for skinny batches
    tk_cap = 1024 if budget >= (80 << 20) else 512
    if tk_max is not None:
        tk_cap = min(tk_cap, tk_max)

    gb_bytes = 2 * 2 * tn * 4
    out_bytes = 2 * B * tn * osz

    x_resident = True
    if D_in <= tk_cap:
        tk = D_in
    else:
        acc_bytes = B * tn * 4
        head = max(budget - out_bytes - gb_bytes - acc_bytes - (1 << 20), 1 << 20)
        x_full = 2 * B * D_in * xsz
        x_resident = x_full <= head // 2
        if x_resident:
            tk_fit = (head - x_full) // max(w_buffers * tn * wsz, 1)
        else:
            tk_fit = head // max(2 * B * xsz + w_buffers * tn * wsz, 1)
        tk = _pick_tile(D_in, min(tk_cap, max(int(tk_fit), 128)))
    multi_k = tk < D_in

    if not multi_k:
        x_resident = True
        need = 2 * B * D_in * xsz + w_buffers * tn * D_in * wsz + out_bytes + gb_bytes
        if need > budget and w_buffers > 2:
            w_buffers = 2
    # TODO(synk): very large B (full-batch residency of x/acc/out blowing the
    # VMEM budget) would need a batch-tiled two-pass / Welford BN path.

    # gamma / beta merged into one (2, D_out) array -> one tiny DMA per grid step.
    gb = jnp.concatenate(
        [gamma.reshape(1, D_out), beta.reshape(1, D_out)], axis=0
    ).astype(_F32)

    cost = pl.CostEstimate(
        flops=2 * B * D_in * D_out,
        transcendentals=0,
        bytes_accessed=(B * D_in * xsz + D_out * D_in * wsz
                        + 2 * D_out * 4 + B * D_out * osz),
    )

    def build(wb):
        if not multi_k:
            kernel = functools.partial(_fc_bn_kernel_single,
                                       relu=relu, eps=float(eps))
            grid = (D_out // tn,)
            in_specs = [
                pl.BlockSpec((B, D_in), lambda j: (0, 0)),        # x: fetched once
                _w_block_spec((tn, D_in), lambda j: (j, 0), wb),  # W tile
                pl.BlockSpec((2, tn), lambda j: (0, j)),          # [gamma; beta]
            ]
            out_specs = pl.BlockSpec((B, tn), lambda j: (0, j))
            scratch = []
            dims = ("parallel",)
        else:
            kernel = functools.partial(_fc_bn_kernel_multi, relu=relu,
                                       eps=float(eps), tk=tk,
                                       x_resident=x_resident)
            grid = (D_out // tn, D_in // tk)
            if x_resident:
                x_spec = pl.BlockSpec((B, D_in), lambda j, k: (0, 0))
            else:
                x_spec = pl.BlockSpec((B, tk), lambda j, k: (0, k))
            in_specs = [
                x_spec,
                _w_block_spec((tn, tk), lambda j, k: (j, k), wb),
                pl.BlockSpec((2, tn), lambda j, k: (0, j)),
            ]
            out_specs = pl.BlockSpec((B, tn), lambda j, k: (0, j))
            scratch = [pltpu.VMEM((B, tn), _F32)]
            dims = ("parallel", "arbitrary")

        return pl.pallas_call(
            kernel,
            out_shape=jax.ShapeDtypeStruct((B, D_out), out_dtype),
            grid_spec=pltpu.PrefetchScalarGridSpec(
                num_scalar_prefetch=0,
                grid=grid,
                in_specs=in_specs,
                out_specs=out_specs,
                scratch_shapes=scratch,
            ),
            compiler_params=pltpu.CompilerParams(
                dimension_semantics=dims,
                vmem_limit_bytes=int(budget),
            ),
            cost_estimate=cost,
        )

    try:
        return build(w_buffers)(x, w, gb)
    except Exception:
        if w_buffers <= 2:
            raise
        # Deep W buffering rejected (API / VMEM): retry with default 2-deep.
        return build(2)(x, w, gb)


# --------------------------------------------------------------------------
# Init + reference
# --------------------------------------------------------------------------
def init_fc_params(key, input_dim, output_dim):
    """Deterministic init mirroring weights_init_kaiming."""
    k_w, k_g = jax.random.split(key)
    # Linear: kaiming_normal_(a=0, mode='fan_out') -> std = sqrt(2 / fan_out)
    w_std = (2.0 / output_dim) ** 0.5
    w = w_std * jax.random.normal(k_w, (output_dim, input_dim), dtype=jnp.float32)
    b = jnp.zeros((output_dim,), dtype=jnp.float32)
    # BatchNorm1d: weight ~ N(1.0, 0.02), bias = 0
    gamma = 1.0 + 0.02 * jax.random.normal(k_g, (output_dim,), dtype=jnp.float32)
    beta = jnp.zeros((output_dim,), dtype=jnp.float32)
    return w, b, gamma, beta


def fc_reference(x, w, b, gamma, beta, *, relu=False, eps=1e-5):
    """Pure-JAX reference (includes the Linear bias, which BN then cancels)."""
    y = x @ w.T + b
    mean = jnp.mean(y, axis=0, keepdims=True)
    var = jnp.mean((y - mean) ** 2, axis=0, keepdims=True)
    out = (y - mean) / jnp.sqrt(var + eps) * gamma + beta
    if relu:
        out = jnp.where(out >= 0, out, 0.1 * out)
    return out


if __name__ == "__main__":
    # TODO(synk): BatchNorm1d's running_mean/running_var buffer updates (a training
    # side-effect, not part of the returned activation) are not reproduced here.
    key = jax.random.PRNGKey(0)
    k_in, k_param = jax.random.split(key)

    ok = True

    # Shapes consistent with Fc(input_dim=32, output_dim=512), batch=8.
    B, input_dim, output_dim = 8, 32, 512
    x = jax.random.normal(k_in, (B, input_dim), dtype=jnp.float32)
    w, b, gamma, beta = init_fc_params(k_param, input_dim, output_dim)
    for relu in (False, True):
        out = jax.block_until_ready(fc_forward(x, w, b, gamma, beta, relu=relu))
        ref = fc_reference(x, w, b, gamma, beta, relu=relu)
        ok &= out.shape == (B, output_dim)
        ok &= bool(jnp.allclose(out, ref, atol=1e-4, rtol=1e-4))

    # Exercise the multi-K (f32 accumulator + resident-x slab slicing) path on a
    # still-small problem by capping the tile sizes.
    B2, in2, out2 = 16, 256, 256
    x2 = jax.random.normal(k_in, (B2, in2), dtype=jnp.float32)
    w2, b2, g2, be2 = init_fc_params(k_param, in2, out2)
    o2 = jax.block_until_ready(
        fc_forward(x2, w2, b2, g2, be2, relu=True, tn_max=128, tk_max=128))
    r2 = fc_reference(x2, w2, b2, g2, be2, relu=True)
    ok &= o2.shape == (B2, out2)
    ok &= bool(jnp.allclose(o2, r2, atol=1e-4, rtol=1e-4))

    assert ok, "mismatch vs reference"
    print("KERNEL_OK")
</pallas_src>

<mosaic_0001>
module attributes {stable_mosaic.version = 11 : i64} {
  func.func @_fc_bn_kernel_single(%arg0: i32, %arg1: memref<8x32xf32, #tpu.memory_space<vmem>>, %arg2: memref<256x32xf32, #tpu.memory_space<vmem>>, %arg3: memref<2x256xf32, #tpu.memory_space<vmem>>, %arg4: memref<8x256xf32, #tpu.memory_space<vmem>>) attributes {dimension_semantics = [#tpu.dimension_semantics<parallel>], iteration_bounds = array<i64: 2>, scalar_prefetch = 0 : i64, scratch_operands = 0 : i64, tpu.core_type = #tpu.core_type<tc>, window_params = [{pipeline_mode = #tpu.pipeline_mode<synchronous>, transform_indices = @transform_0, window_bounds = array<i64: 8, 32>}, {transform_indices = @transform_1, window_bounds = array<i64: 256, 32>}, {transform_indices = @transform_2, window_bounds = array<i64: 2, 256>}, {transform_indices = @transform_3, window_bounds = array<i64: 8, 256>}]} {
    %c0 = arith.constant 0 : index
    %c0_0 = arith.constant 0 : index
    %0 = vector.load %arg1[%c0, %c0_0] : memref<8x32xf32, #tpu.memory_space<vmem>>, vector<8x32xf32>
    %c0_1 = arith.constant 0 : index
    %c0_2 = arith.constant 0 : index
    %1 = vector.load %arg2[%c0_1, %c0_2] : memref<256x32xf32, #tpu.memory_space<vmem>>, vector<256x32xf32>
    %cst = arith.constant dense<0.000000e+00> : vector<8x256xf32>
    %2 = tpu.matmul %0, %1, %cst {dimension_numbers = #tpu.dot_dimension_numbers<[1], [1], [0], [0], [0, 0, 1, 0], [], []>} : vector<8x32xf32>, vector<256x32xf32>, vector<8x256xf32> -> vector<8x256xf32>
    %c0_3 = arith.constant 0 : index
    %c0_4 = arith.constant 0 : index
    %3 = vector.load %arg3[%c0_3, %c0_4] : memref<2x256xf32, #tpu.memory_space<vmem>>, vector<2x256xf32>
    %4 = vector.extract_strided_slice %3 {offsets = [0, 0], sizes = [1, 256], strides = [1, 1]} : vector<2x256xf32> to vector<1x256xf32>
    %5 = vector.extract_strided_slice %3 {offsets = [1, 0], sizes = [1, 256], strides = [1, 1]} : vector<2x256xf32> to vector<1x256xf32>
    %cst_5 = arith.constant dense<0.000000e+00> : vector<256xf32>
    %6 = vector.multi_reduction <add>, %2, %cst_5 [0] : vector<8x256xf32> to vector<256xf32>
    %7 = vector.shape_cast %6 : vector<256xf32> to vector<1x256xf32>
    %cst_6 = arith.constant 8.000000e+00 : f32
    %8 = vector.broadcast %cst_6 : f32 to vector<1x256xf32>
    %9 = arith.divf %7, %8 : vector<1x256xf32>
    %10 = vector.broadcast %9 : vector<1x256xf32> to vector<8x256xf32>
    %11 = arith.subf %2, %10 : vector<8x256xf32>
    %12 = arith.mulf %11, %11 : vector<8x256xf32>
    %cst_7 = arith.constant dense<0.000000e+00> : vector<256xf32>
    %13 = vector.multi_reduction <add>, %12, %cst_7 [0] : vector<8x256xf32> to vector<256xf32>
    %14 = vector.shape_cast %13 : vector<256xf32> to vector<1x256xf32>
    %cst_8 = arith.constant 8.000000e+00 : f32
    %15 = vector.broadcast %cst_8 : f32 to vector<1x256xf32>
    %16 = arith.divf %14, %15 : vector<1x256xf32>
    %cst_9 = arith.constant 9.99999974E-6 : f32
    %17 = vector.broadcast %cst_9 : f32 to vector<1x256xf32>
    %18 = arith.addf %16, %17 : vector<1x256xf32>
    %19 = math.rsqrt %18 : vector<1x256xf32>
    %20 = arith.mulf %4, %19 : vector<1x256xf32>
    %21 = vector.broadcast %20 : vector<1x256xf32> to vector<8x256xf32>
    %22 = arith.mulf %11, %21 : vector<8x256xf32>
    %23 = vector.broadcast %5 : vector<1x256xf32> to vector<8x256xf32>
    %24 = arith.addf %22, %23 : vector<8x256xf32>
    %c0_10 = arith.constant 0 : index
    %c0_11 = arith.constant 0 : index
    %25 = vector.load %arg4[%c0_10, %c0_11] : memref<8x256xf32, #tpu.memory_space<vmem>>, vector<8x256xf32>
    tpu.vector_store %arg4[%c0_10, %c0_11], %24 {strides = array<i32>} : memref<8x256xf32, #tpu.memory_space<vmem>>, vector<8x256xf32>,
    return
  }
  func.func @transform_0(%arg0: i32) -> (i32, i32) {
    %c0_i32 = arith.constant 0 : i32
    %c0_i32_0 = arith.constant 0 : i32
    %c0_i32_1 = arith.constant 0 : i32
    return %c0_i32, %c0_i32_0 : i32, i32
  }
  func.func @transform_1(%arg0: i32) -> (i32, i32) {
    %c0_i32 = arith.constant 0 : i32
    %c0_i32_0 = arith.constant 0 : i32
    return %arg0, %c0_i32 : i32, i32
  }
  func.func @transform_2(%arg0: i32) -> (i32, i32) {
    %c0_i32 = arith.constant 0 : i32
    %c0_i32_0 = arith.constant 0 : i32
    return %c0_i32, %arg0 : i32, i32
  }
  func.func @transform_3(%arg0: i32) -> (i32, i32) {
    %c0_i32 = arith.constant 0 : i32
    %c0_i32_0 = arith.constant 0 : i32
    return %c0_i32, %arg0 : i32, i32
  }
}

</mosaic_0001>

<llo_original>
// kernel: tpu_custom_call.1
$region0: #{tpu_custom_call.1}
  #allocation0 [shape = 'u32[]', space=smem, size = 0x4, offset = 0x4, fixed_abs, tag = 'smem constant byte address 0x4 - core index']
  #allocation1 [shape = 'u32[144,128]{1,0:T(1,128)}', space=vmem, size = 0x12000, scoped, tag = 'internal scratch']
  %s0 = inlined_call_operand.vmem [shape: f32[8,32], index: 0, kind: input, shape index: {}]
  %s1 = inlined_call_operand.vmem [shape: f32[512,32], index: 1, kind: input, shape index: {}]
  %s2 = inlined_call_operand.vmem [shape: f32[2,512], index: 2, kind: input, shape index: {}]
  %s3 = inlined_call_operand.hbm [shape: f32[8,512], index: 3, kind: output, shape index: {}]
  %s4 = sld [smem:[#allocation0]]
  $region45: #{tpu_custom_call.1} parent=0
    _
  %s6 = ssub.s32 1, %s4
  %s7 = scalar_select 0, %s6, %s4
  $region1: #{tpu_custom_call.1} parent=0
    #allocation2 [shape = 'u8[16384]{0}', space=vmem, size = 0x4000, scoped, tag = 'output window, operand 0']
    #allocation3 [shape = 's32[2]{0}', space=sflag, size = 0x8, scoped, tag = 'scoped memory for tpu_custom_call.1']
    %8 = vsyncpa [#allocation3], 0
    %s9 = scalar_lea.sflag [#allocation3], 1
    %10 = vsyncpa %s9, 0
    loop: start=0, step=1, limit=4
    $region2: #{tpu_custom_call.1} parent=1 // loop_pre_header
      _
    $region3: #{tpu_custom_call.1} parent=1 // loop_header
      %s12 = sphi 0, %s16
      %p13 = scmp.ge.s32.totalorder %s12, 4
      %s20 = sphi 0, %s20
      %s22 = sphi 0, %s20
      %s23 = sphi 0, %s22
      %s37 = sphi 0, %s23
      %s43 = sphi 0, %s45
      %s46 = sphi 0, %s43
      %s47 = sphi 0, %s46
      %s63 = sphi 0, %s47
      %s69 = sphi 0, %s71
      %s72 = sphi 0, %s69
      %s73 = sphi 0, %s72
      %s89 = sphi 0, %s73
      %s95 = sphi 0, %s97
      %s98 = sphi 0, %s95
      %s99 = sphi 0, %s98
      %s115 = sphi 0, %s99
    $region4: #{tpu_custom_call.1} parent=1 // loop_header_branch
      %15 = sbr.rel (%p13) target = $region8
    $region5: #{tpu_custom_call.1} parent=1 // loop_body
      %s17 = ssub.s32 %s12, 1
      %s18 = ssub.s32 %s12, 2
      %s19 = sadd.s32 %s12, 1
      %s21 = sadd.s32 %s20, 1
      %p24 = scmp.eq.s32.totalorder %s12, 1
      %p25 = scmp.ne.s32.totalorder %s20, %s22
      %p26 = scmp.eq.s32.totalorder %s12, 0
      %p27 = por %p25, %p26
      %p28 = scmp.ne.s32.totalorder %s20, %s22
      %p29 = scmp.eq.s32.totalorder %s17, 1
      %p30 = por %p28, %p29
      %p31 = scmp.ne.s32.totalorder %s22, %s23
      %p32 = scmp.eq.s32.totalorder %s17, 0
      %p33 = por %p31, %p32
      %p34 = scmp.ne.s32.totalorder %s22, %s23
      %p35 = scmp.eq.s32.totalorder %s18, 1
      %p36 = por %p34, %p35
      %p38 = scmp.ne.s32.totalorder %s23, %s37
      %p39 = scmp.eq.s32.totalorder %s18, 0
      %p40 = por %p38, %p39
      %s41 = ssub.s32 %s12, %s19
      %p42 = scmp.eq.s32.totalorder %s41, 0
      %s44 = sadd.s32 %s43, 1
      %s45 = scalar_select %p42, %s43, %s44
      %p48 = pneg %p42
      %p49 = scmp.eq.s32.totalorder %s12, 1
      %p50 = por %p48, %p49
      %p51 = scmp.ne.s32.totalorder %s43, %s46
      %p52 = scmp.eq.s32.totalorder %s12, 0
      %p53 = por %p51, %p52
      %p54 = scmp.ne.s32.totalorder %s43, %s46
      %p55 = scmp.eq.s32.totalorder %s17, 1
      %p56 = por %p54, %p55
      %p57 = scmp.ne.s32.totalorder %s46, %s47
      %p58 = scmp.eq.s32.totalorder %s17, 0
      %p59 = por %p57, %p58
      %p60 = scmp.ne.s32.totalorder %s46, %s47
      %p61 = scmp.eq.s32.totalorder %s18, 1
      %p62 = por %p60, %p61
      %p64 = scmp.ne.s32.totalorder %s47, %s63
      %p65 = scmp.eq.s32.totalorder %s18, 0
      %p66 = por %p64, %p65
      %s67 = ssub.s32 %s12, %s19
      %p68 = scmp.eq.s32.totalorder %s67, 0
      %s70 = sadd.s32 %s69, 1
      %s71 = scalar_select %p68, %s69, %s70
      %p74 = pneg %p68
      %p75 = scmp.eq.s32.totalorder %s12, 1
      %p76 = por %p74, %p75
      %p77 = scmp.ne.s32.totalorder %s69, %s72
      %p78 = scmp.eq.s32.totalorder %s12, 0
      %p79 = por %p77, %p78
      %p80 = scmp.ne.s32.totalorder %s69, %s72
      %p81 = scmp.eq.s32.totalorder %s17, 1
      %p82 = por %p80, %p81
      %p83 = scmp.ne.s32.totalorder %s72, %s73
      %p84 = scmp.eq.s32.totalorder %s17, 0
      %p85 = por %p83, %p84
      %p86 = scmp.ne.s32.totalorder %s72, %s73
      %p87 = scmp.eq.s32.totalorder %s18, 1
      %p88 = por %p86, %p87
      %p90 = scmp.ne.s32.totalorder %s73, %s89
      %p91 = scmp.eq.s32.totalorder %s18, 0
      %p92 = por %p90, %p91
      %s93 = ssub.s32 %s12, %s19
      %p94 = scmp.eq.s32.totalorder %s93, 0
      %s96 = sadd.s32 %s95, 1
      %s97 = scalar_select %p94, %s95, %s96
      %p100 = pneg %p94
      %p101 = scmp.eq.s32.totalorder %s12, 1
      %p102 = por %p100, %p101
      %p103 = scmp.ne.s32.totalorder %s95, %s98
      %p104 = scmp.eq.s32.totalorder %s12, 0
      %p105 = por %p103, %p104
      %p106 = scmp.ne.s32.totalorder %s95, %s98
      %p107 = scmp.eq.s32.totalorder %s17, 1
      %p108 = por %p106, %p107
      %p109 = scmp.ne.s32.totalorder %s98, %s99
      %p110 = scmp.eq.s32.totalorder %s17, 0
      %p111 = por %p109, %p110
      %p112 = scmp.ne.s32.totalorder %s98, %s99
      %p113 = scmp.eq.s32.totalorder %s18, 1
      %p114 = por %p112, %p113
      %p116 = scmp.ne.s32.totalorder %s99, %s115
      %p117 = scmp.eq.s32.totalorder %s18, 0
      %p118 = por %p116, %p117
      %p119 = scmp.le.s32.totalorder 1, %s12
      %p120 = scmp.lt.s32.totalorder %s12, 3
      %p121 = pnand %p119, %p120
      %p122 = pneg %p121
      // Predicated region
      $region9: #{tpu_custom_call.1} parent=5 // pred_check
        _
      $region10: #{tpu_custom_call.1} parent=5 // pred_check_branch
        %124 = sbr.rel (%p121) target = $region12
      $region11: #{tpu_custom_call.1} parent=5 // pred_region
        %s125 = ssub.s32 %s12, 1
        // Predicated region
        $region13: #{tpu_custom_call.1} parent=11 // pred_check
          %p126 = pneg %p33
        $region14: #{tpu_custom_call.1} parent=11 // pred_check_branch
          %128 = sbr.rel (%p126) target = $region16
        $region15: #{tpu_custom_call.1} parent=11 // pred_region
          _
        $region16: #{tpu_custom_call.1} parent=11 // pred_fallthru
          _
      $region12: #{tpu_custom_call.1} parent=5 // pred_fallthru
        _
      %p129 = scmp.lt.s32.totalorder %s12, 2
      // Predicated region
      $region17: #{tpu_custom_call.1} parent=5 // pred_check
        %p130 = pneg %p129
      $region18: #{tpu_custom_call.1} parent=5 // pred_check_branch
        %132 = sbr.rel (%p130) target = $region20
      $region19: #{tpu_custom_call.1} parent=5 // pred_region
        // Predicated region
        $region21: #{tpu_custom_call.1} parent=19 // pred_check
          %p133 = pneg %p53
        $region22: #{tpu_custom_call.1} parent=19 // pred_check_branch
          %135 = sbr.rel (%p133) target = $region24
        $region23: #{tpu_custom_call.1} parent=19 // pred_region
          %s136 = smul.u32 32, %s12
          %p137 = scmp.lt.s32.totalorder %s136, 63
          %s138 = scalar_select %p137, %s136, 63
          %s139 = smul.addr %s138, 8
          %s140 = scalar_lea.vmem %s1, %s139
          %s141 = smul.u32 32, %s12
        $region24: #{tpu_custom_call.1} parent=19 // pred_fallthru
          _
        // Predicated region
        $region25: #{tpu_custom_call.1} parent=19 // pred_check
          %p142 = pneg %p79
        $region26: #{tpu_custom_call.1} parent=19 // pred_check_branch
          %144 = sbr.rel (%p142) target = $region28
        $region27: #{tpu_custom_call.1} parent=19 // pred_region
          %s145 = smul.u32 2, %s12
          %p146 = scmp.lt.s32.totalorder %s145, 3
          %s147 = scalar_select %p146, %s145, 3
          %s148 = smul.addr %s147, 2
          %s149 = scalar_lea.vmem %s2, %s148
          %s150 = smul.u32 2, %s12
        $region28: #{tpu_custom_call.1} parent=19 // pred_fallthru
          _
      $region20: #{tpu_custom_call.1} parent=5 // pred_fallthru
        _
      %p151 = scmp.le.s32.totalorder 1, %s12
      %p152 = scmp.lt.s32.totalorder %s12, 3
      %p153 = pnand %p151, %p152
      %p154 = pneg %p153
      // Predicated region
      $region29: #{tpu_custom_call.1} parent=5 // pred_check
        _
      $region30: #{tpu_custom_call.1} parent=5 // pred_check_branch
        %156 = sbr.rel (%p153) target = $region32
      $region31: #{tpu_custom_call.1} parent=5 // pred_region
        %s157 = ssub.s32 %s12, 1
        %p158 = pneg %p33
        %p159 = pneg %p30
        %s160 = smul.u32 32, %s17
        %p161 = scmp.lt.s32.totalorder %s160, 63
        %s162 = scalar_select %p161, %s160, 63
        %s163 = smul.addr %s162, 8
        %s164 = scalar_lea.vmem %s1, %s163
        %p165 = pneg %p59
        %p166 = pneg %p56
        %s167 = smul.u32 2, %s17
        %p168 = scmp.lt.s32.totalorder %s167, 3
        %s169 = scalar_select %p168, %s167, 3
        %s170 = smul.addr %s169, 2
        %s171 = scalar_lea.vmem %s2, %s170
        %p172 = pneg %p85
        %p173 = pneg %p82
        %p174 = pneg %p111
        %p175 = pneg %p108
        %s176 = sand.u32 %s98, 1
        %s177 = scalar_lea.sflag [#allocation3], %s176
        %s178 = sand.u32 %s98, 1
        %s179 = smul.addr %s178, 16
        %s180 = scalar_lea.vmem [#allocation2], %s179
        %s181 = smul.u32 32, %s17
        %p182 = scmp.lt.s32.totalorder %s181, 63
        %s183 = scalar_select %p182, %s181, 63
        %s184 = smul.addr %s183, 8
        %s185 = scalar_lea.vmem %s1, %s184
        %s186 = smul.u32 32, %s17
        %s187 = smul.u32 2, %s17
        %p188 = scmp.lt.s32.totalorder %s187, 3
        %s189 = scalar_select %p188, %s187, 3
        %s190 = smul.addr %s189, 2
        %s191 = scalar_lea.vmem %s2, %s190
        %s192 = smul.u32 2, %s17
        %s193 = smul.u32 2, %s17
        %v194 = vld [vmem:[%s0] sm:$0xff]
        %v195 = vld [vmem:[%s185] sm:$0xff]
        %v196 = vld [vmem:[%s185 + $0x8] sm:$0xff]
        %v197 = vld [vmem:[%s185 + $0x10] sm:$0xff]
        %v198 = vld [vmem:[%s185 + $0x18] sm:$0xff]
        %v199 = vld [vmem:[%s185 + $0x20] sm:$0xff]
        %v200 = vld [vmem:[%s185 + $0x28] sm:$0xff]
        %v201 = vld [vmem:[%s185 + $0x30] sm:$0xff]
        %v202 = vld [vmem:[%s185 + $0x38] sm:$0xff]
        %v203 = vld [vmem:[%s185 + $0x40] sm:$0xff]
        %v204 = vld [vmem:[%s185 + $0x48] sm:$0xff]
        %v205 = vld [vmem:[%s185 + $0x50] sm:$0xff]
        %v206 = vld [vmem:[%s185 + $0x58] sm:$0xff]
        %v207 = vld [vmem:[%s185 + $0x60] sm:$0xff]
        %v208 = vld [vmem:[%s185 + $0x68] sm:$0xff]
        %v209 = vld [vmem:[%s185 + $0x70] sm:$0xff]
        %v210 = vld [vmem:[%s185 + $0x78] sm:$0xff]
        %v211 = vld [vmem:[%s185 + $0x80] sm:$0xff]
        %v212 = vld [vmem:[%s185 + $0x88] sm:$0xff]
        %v213 = vld [vmem:[%s185 + $0x90] sm:$0xff]
        %v214 = vld [vmem:[%s185 + $0x98] sm:$0xff]
        %v215 = vld [vmem:[%s185 + $0xa0] sm:$0xff]
        %v216 = vld [vmem:[%s185 + $0xa8] sm:$0xff]
        %v217 = vld [vmem:[%s185 + $0xb0] sm:$0xff]
        %v218 = vld [vmem:[%s185 + $0xb8] sm:$0xff]
        %v219 = vld [vmem:[%s185 + $0xc0] sm:$0xff]
        %v220 = vld [vmem:[%s185 + $0xc8] sm:$0xff]
        %v221 = vld [vmem:[%s185 + $0xd0] sm:$0xff]
        %v222 = vld [vmem:[%s185 + $0xd8] sm:$0xff]
        %v223 = vld [vmem:[%s185 + $0xe0] sm:$0xff]
        %v224 = vld [vmem:[%s185 + $0xe8] sm:$0xff]
        %v225 = vld [vmem:[%s185 + $0xf0] sm:$0xff]
        %v226 = vld [vmem:[%s185 + $0xf8] sm:$0xff]
        %vm227 = vcmask 261120
        %v229 = vsel %vm227, %v194, 0
        %v232 = vsel %vm227, %v195, 0
        %v235 = vsel %vm227, %v196, 0
        %v238 = vsel %vm227, %v197, 0
        %v241 = vsel %vm227, %v198, 0
        %v244 = vsel %vm227, %v199, 0
        %v247 = vsel %vm227, %v200, 0
        %v250 = vsel %vm227, %v201, 0
        %v253 = vsel %vm227, %v202, 0
        %v256 = vsel %vm227, %v203, 0
        %v259 = vsel %vm227, %v204, 0
        %v262 = vsel %vm227, %v205, 0
        %v265 = vsel %vm227, %v206, 0
        %v268 = vsel %vm227, %v207, 0
        %v271 = vsel %vm227, %v208, 0
        %v274 = vsel %vm227, %v209, 0
        %v277 = vsel %vm227, %v210, 0
        %v280 = vsel %vm227, %v211, 0
        %v283 = vsel %vm227, %v212, 0
        %v286 = vsel %vm227, %v213, 0
        %v289 = vsel %vm227, %v214, 0
        %v292 = vsel %vm227, %v215, 0
        %v295 = vsel %vm227, %v216, 0
        %v298 = vsel %vm227, %v217, 0
        %v301 = vsel %vm227, %v218, 0
        %v304 = vsel %vm227, %v219, 0
        %v307 = vsel %vm227, %v220, 0
        %v310 = vsel %vm227, %v221, 0
        %v313 = vsel %vm227, %v222, 0
        %v316 = vsel %vm227, %v223, 0
        %v319 = vsel %vm227, %v224, 0
        %v322 = vsel %vm227, %v225, 0
        %v325 = vsel %vm227, %v226, 0
        %327 = vmatprep.subr.mxu0 0.0
        %328 = vmatpush1.xpose.msra.mxu0 %v232
        %329 = vmatprep.subr.mxu0 0.0
        %330 = vmatpush1.xpose.msra.mxu0 %v235
        %331 = vmatprep.subr.mxu0 0.0
        %332 = vmatpush1.xpose.msra.mxu0 %v238
        %333 = vmatprep.subr.mxu0 0.0
        %334 = vmatpush1.xpose.msra.mxu0 %v241
        %335 = vmatprep.subr.mxu0 0.0
        %336 = vmatpush1.xpose.msra.mxu0 %v244
        %337 = vmatprep.subr.mxu0 0.0
        %338 = vmatpush1.xpose.msra.mxu0 %v247
        %339 = vmatprep.subr.mxu0 0.0
        %340 = vmatpush1.xpose.msra.mxu0 %v250
        %341 = vmatprep.subr.mxu0 0.0
        %342 = vmatpush1.xpose.msra.mxu0 %v253
        %343 = vmatprep.subr.mxu0 0.0
        %344 = vmatpush1.xpose.msra.mxu0 %v256
        %345 = vmatprep.subr.mxu0 0.0
        %346 = vmatpush1.xpose.msra.mxu0 %v259
        %347 = vmatprep.subr.mxu0 0.0
        %348 = vmatpush1.xpose.msra.mxu0 %v262
        %349 = vmatprep.subr.mxu0 0.0
        %350 = vmatpush1.xpose.msra.mxu0 %v265
        %351 = vmatprep.subr.mxu0 0.0
        %352 = vmatpush1.xpose.msra.mxu0 %v268
        %353 = vmatprep.subr.mxu0 0.0
        %354 = vmatpush1.xpose.msra.mxu0 %v271
        %355 = vmatprep.subr.mxu0 0.0
        %356 = vmatpush1.xpose.msra.mxu0 %v274
        %357 = vmatprep.subr.mxu0 0.0
        %358 = vmatpush1.xpose.msra.mxu0 %v277
        %359 = vmatprep.subr.mxu0 0.0
        %360 = vmatpush1.xpose.msra.mxu0 %v280
        %361 = vmatprep.subr.mxu0 0.0
        %362 = vmatpush1.xpose.msra.mxu0 %v283
        %363 = vmatprep.subr.mxu0 0.0
        %364 = vmatpush1.xpose.msra.mxu0 %v286
        %365 = vmatprep.subr.mxu0 0.0
        %366 = vmatpush1.xpose.msra.mxu0 %v289
        %367 = vmatprep.subr.mxu0 0.0
        %368 = vmatpush1.xpose.msra.mxu0 %v292
        %369 = vmatprep.subr.mxu0 0.0
        %370 = vmatpush1.xpose.msra.mxu0 %v295
        %371 = vmatprep.subr.mxu0 0.0
        %372 = vmatpush1.xpose.msra.mxu0 %v298
        %373 = vmatprep.subr.mxu0 0.0
        %374 = vmatpush1.xpose.msra.mxu0 %v301
        %375 = vmatprep.subr.mxu0 0.0
        %376 = vmatpush1.xpose.msra.mxu0 %v304
        %377 = vmatprep.subr.mxu0 0.0
        %378 = vmatpush1.xpose.msra.mxu0 %v307
        %379 = vmatprep.subr.mxu0 0.0
        %380 = vmatpush1.xpose.msra.mxu0 %v310
        %381 = vmatprep.subr.mxu0 0.0
        %382 = vmatpush1.xpose.msra.mxu0 %v313
        %383 = vmatprep.subr.mxu0 0.0
        %384 = vmatpush1.xpose.msra.mxu0 %v316
        %385 = vmatprep.subr.mxu0 0.0
        %386 = vmatpush1.xpose.msra.mxu0 %v319
        %387 = vmatprep.subr.mxu0 0.0
        %388 = vmatpush1.xpose.msra.mxu0 %v322
        %389 = vmatprep.subr.mxu0 0.0
        %390 = vmatpush1.xpose.msra.mxu0 %v325
        %391 = vmatprep.mubr.f32.mxu0 0.0
        %392 = vmatmul.mubr.f32.gmra.mrb[0].mxu0 %v229
        %v393 = vpop.f32.mrb[0].mxu0
        %v394 = vadd.f32 0.0, %v393
        %v395 = vpop.f32.mrb[0].mxu0
        %v396 = vadd.f32 0.0, %v395
        %397 = vdwg.mxu0
        %v398 = vld [vmem:[%s191] sm:$0xf]
        %v399 = vrot.slane %v394, 4
        %v400 = vadd.f32 %v394, %v399
        %v401 = vrot.slane %v400, 2
        %v402 = vadd.f32 %v400, %v401
        %v403 = vrot.slane %v402, 1
        %v404 = vadd.f32 %v402, %v403
        %v405 = vrot.slane %v396, 4
        %v406 = vadd.f32 %v396, %v405
        %v407 = vrot.slane %v406, 2
        %v408 = vadd.f32 %v406, %v407
        %v409 = vrot.slane %v408, 1
        %v410 = vadd.f32 %v408, %v409
        %v411 = vrcp.pop 8.0
        %v412 = vmul.f32 %v404, %v411
        %v413 = vmul.f32 %v410, %v411
        %v414 = vsub.f32 %v394, %v412
        %v415 = vsub.f32 %v396, %v413
        %v416 = vmul.f32 %v414, %v414
        %v417 = vmul.f32 %v415, %v415
        %v418 = vrot.slane %v416, 4
        %v419 = vadd.f32 %v416, %v418
        %v420 = vrot.slane %v419, 2
        %v421 = vadd.f32 %v419, %v420
        %v422 = vrot.slane %v421, 1
        %v423 = vadd.f32 %v421, %v422
        %v424 = vrot.slane %v417, 4
        %v425 = vadd.f32 %v417, %v424
        %v426 = vrot.slane %v425, 2
        %v427 = vadd.f32 %v425, %v426
        %v428 = vrot.slane %v427, 1
        %v429 = vadd.f32 %v427, %v428
        %v430 = vmul.f32 %v423, %v411
        %v431 = vmul.f32 %v429, %v411
        %v432 = vadd.f32 %v430, 1e-05
        %v433 = vadd.f32 %v431, 1e-05
        %v434 = vrsqrt.pop %v432
        %v435 = vrsqrt.pop %v433
        %v438 = vcombine.low %v434, %v435
        %v440 = vunpack.c.l.s4 1983009808
        %v441 = vunpack.c.0.s8 %v440
        %v442 = vlaneseq
        %v443 = vshrl.u32 %v442, 7
        %v444 = vsub.s32 %v441, %v443
        %v445 = vrot.slane %v438, %v444
        %v447 = vmul.f32 %v398, %v445
        %v449 = vlaneseq
        %v450 = vshrl.u32 %v449, 7
        %v451 = vsub.s32 0, %v450
        %v452 = vrot.slane %v447, %v451
        %v453 = vlaneseq
        %v454 = vshrl.u32 %v453, 7
        %v455 = vsub.s32 2, %v454
        %v456 = vrot.slane %v447, %v455
        %v459 = vlaneseq
        %v460 = vshrl.u32 %v459, 7
        %v461 = vsub.s32 0, %v460
        %v462 = vrot.slane %v452, %v461
        %v463 = vlaneseq
        %v464 = vshrl.u32 %v463, 7
        %v465 = vsub.s32 0, %v464
        %v466 = vrot.slane %v456, %v465
        %v467 = vmul.f32 %v414, %v462
        %v468 = vmul.f32 %v415, %v466
        %v470 = vlaneseq
        %v471 = vshrl.u32 %v470, 7
        %v472 = vsub.s32 1, %v471
        %v473 = vrot.slane %v398, %v472
        %v474 = vlaneseq
        %v475 = vshrl.u32 %v474, 7
        %v476 = vsub.s32 3, %v475
        %v477 = vrot.slane %v398, %v476
        %v480 = vlaneseq
        %v481 = vshrl.u32 %v480, 7
        %v482 = vsub.s32 1, %v481
        %v483 = vrot.slane %v473, %v482
        %v484 = vlaneseq
        %v485 = vshrl.u32 %v484, 7
        %v486 = vsub.s32 1, %v485
        %v487 = vrot.slane %v477, %v486
        %v488 = vadd.f32 %v467, %v483
        %v489 = vadd.f32 %v468, %v487
        %490 = vst [vmem:[%s180] sm:$0xff] %v488
        %491 = vst [vmem:[%s180 + $0x8] sm:$0xff] %v489
        %s492 = sand.u32 %s98, 1
        %s493 = scalar_lea.sflag [#allocation3], %s492
        %s494 = sand.u32 %s98, 1
        %s495 = smul.addr %s494, 16
        %s496 = scalar_lea.vmem [#allocation2], %s495
        // Predicated region
        $region33: #{tpu_custom_call.1} parent=31 // pred_check
          %p497 = pneg %p108
        $region34: #{tpu_custom_call.1} parent=31 // pred_check_branch
          %499 = sbr.rel (%p497) target = $region36
        $region35: #{tpu_custom_call.1} parent=31 // pred_region
          %s500 = smul.u32 2, %s17
          %s502 = ssub.s32 256, 256
          %503 = vsyncadd %s493, %s502
          %s504 = smul.addr %s500, 128
          %s505 = scalar_lea.hbm %s3, %s504
          %s507 = sshll.u32 %s496, 4
          %s508 = int_to_ptr.vmem [resolvable:$true] %s507
          %510 = dma.vmem_to_hbm [thread:$0]  %s508, 256, %s505, %s493
        $region36: #{tpu_custom_call.1} parent=31 // pred_fallthru
          _
      $region32: #{tpu_custom_call.1} parent=5 // pred_fallthru
        _
      %p511 = scmp.le.s32.totalorder 2, %s12
      // Predicated region
      $region37: #{tpu_custom_call.1} parent=5 // pred_check
        %p512 = pneg %p511
      $region38: #{tpu_custom_call.1} parent=5 // pred_check_branch
        %514 = sbr.rel (%p512) target = $region40
      $region39: #{tpu_custom_call.1} parent=5 // pred_region
        %s515 = ssub.s32 %s12, 2
        // Predicated region
        $region41: #{tpu_custom_call.1} parent=39 // pred_check
          %p516 = pneg %p114
        $region42: #{tpu_custom_call.1} parent=39 // pred_check_branch
          %518 = sbr.rel (%p516) target = $region44
        $region43: #{tpu_custom_call.1} parent=39 // pred_region
          %s519 = sand.u32 %s99, 1
          %s520 = scalar_lea.sflag [#allocation3], %s519
          %s521 = sand.u32 %s99, 1
          %s522 = smul.addr %s521, 16
          %s523 = scalar_lea.vmem [#allocation2], %s522
          %524 = dma.done %s520, 256
        $region44: #{tpu_custom_call.1} parent=39 // pred_fallthru
          _
      $region40: #{tpu_custom_call.1} parent=5 // pred_fallthru
        _
    $region6: #{tpu_custom_call.1} parent=1 // loop_footer
      %s16 = sadd.s32 1, %s12
    $region7: #{tpu_custom_call.1} parent=1 // loop_footer_branch
      %11 = sbr.rel target = $region3
    $region8: #{tpu_custom_call.1} parent=1 // loop_exit
      _
    %525 = vsyncpa [#allocation3], 1
    %s526 = scalar_lea.sflag [#allocation3], 1
    %527 = vsyncpa %s526, 1

</llo_original>
